<compile_context>
chip_gen: v5e
topology: v5e:2x2
jax: 0.10.0
libtpu: 0.0.40
codegen_flags: <defaults>
</compile_context>

<pallas_src>
import jax
import jax.numpy as jnp
from jax import lax
from jax.experimental import pallas as pl
from jax.experimental.pallas import tpu as pltpu


def _attention_kernel(x_ref, w1_ref, b1_ref, w2_ref, o_ref):
    """One attention instance per grid step, entirely in VMEM.

    x_ref  : [S*B, D]   seq-major input, rows flattened as r = s*B + b (free reshape)
    w1_ref : [D, Ap]    attention_w.weight^T, zero-padded A -> Ap lanes (shared)
    b1_ref : [1, Ap]    attention_w.bias, zero-padded (shared, broadcast over rows)
    w2_ref : [1, Ap]    attention_w2.weight, zero-padded (shared)
    o_ref  : [B, D]     attn_output for this instance
    """
    f32 = jnp.float32
    SB, _ = x_ref.shape
    B, _ = o_ref.shape

    x = x_ref[...]                                                   # [S*B, D]

    # Linear(D -> A) + tanh for every (s, b) row with the SHARED weight:
    # one MXU matmul + EUP tanh.  Padded lanes: x@0 + 0 -> tanh(0) = 0.
    h = jnp.tanh(
        jnp.dot(x, w1_ref[...], preferred_element_type=f32) + b1_ref[...]
    )                                                                # [S*B, Ap]

    # Linear(A -> 1, no bias): elementwise mul + lane reduce (padded lanes are
    # zero in w2 so they contribute nothing).  Avoids a degenerate N=1 matmul.
    scores = jnp.sum(h * w2_ref[...], axis=1, keepdims=True)        # [S*B, 1]

    # ---- softmax over the sequence axis, per batch column ----
    # Row r = s*B + b belongs to batch b = r % B.  Group reductions are done
    # with an in-kernel one-hot mask (broadcasted_iota), no extra inputs.
    onehot = (
        lax.broadcasted_iota(jnp.int32, (SB, B), 0) % B
        == lax.broadcasted_iota(jnp.int32, (SB, B), 1)
    )                                                                # [S*B, B]

    # Per-batch max over seq (numerical stability), gathered back per row.
    m = jnp.max(jnp.where(onehot, scores, -jnp.inf), axis=0, keepdims=True)  # [1, B]
    m_row = jnp.sum(jnp.where(onehot, m, 0.0), axis=1, keepdims=True)        # [S*B, 1]

    e = jnp.exp(scores - m_row)                                      # [S*B, 1]

    # Per-batch denominator, gathered back per row; normalize with the EUP
    # approximate reciprocal (divide lowers to a longer VPU/EUP sequence).
    denom = jnp.sum(jnp.where(onehot, e, 0.0), axis=0, keepdims=True)         # [1, B]
    denom_row = jnp.sum(jnp.where(onehot, denom, 0.0), axis=1, keepdims=True)  # [S*B, 1]
    alphas = e * pl.reciprocal(denom_row, approx=True)               # [S*B, 1]

    # Weighted sum over the sequence: alphas broadcast across D lanes (free VPU
    # broadcast), then a tiny selector matmul does the grouped row-sum
    # out[b, d] = sum_{r : r % B == b} alphas[r] * x[r, d].
    weighted = x * alphas                                            # [S*B, D]
    sel = (
        lax.broadcasted_iota(jnp.int32, (B, SB), 1) % B
        == lax.broadcasted_iota(jnp.int32, (B, SB), 0)
    ).astype(f32)                                                    # [B, S*B]
    o_ref[...] = jnp.dot(sel, weighted,
                         preferred_element_type=f32).astype(o_ref.dtype)  # [B, D]


def make_attention_forward(w1, b1, w2):
    """Builds the forward fn. Weight restructuring happens ONCE here (hoisted
    out of the hot path per review) and is closed over by the jitted forward.

    w1: [A, D] (attention_w.weight), b1: [A] (attention_w.bias),
    w2: [1, A] (attention_w2.weight).
    Returned fn accepts x of shape [S, B, D] (single instance, returns [B, D])
    or [N, S, B, D] (N independent instances, returns [N, B, D])."""
    f32 = jnp.float32
    A, D = w1.shape
    Ap = ((A + 127) // 128) * 128            # pad attention dim to full lanes

    # ---- one-time weight restructuring (layout plumbing only) ----
    w1_p = jnp.zeros((D, Ap), f32).at[:, :A].set(jnp.transpose(w1).astype(f32))
    b1_p = jnp.zeros((1, Ap), f32).at[0, :A].set(b1.astype(f32))
    w2_p = jnp.zeros((1, Ap), f32).at[0, :A].set(w2.reshape(-1).astype(f32))

    @jax.jit
    def forward(x):
        squeeze = (x.ndim == 3)
        x4 = x[None] if squeeze else x                       # [N, S, B, D]
        N, S, B, Dx = x4.shape
        assert Dx == D, (Dx, D)

        # Free contiguous reshape (no HBM transpose): rows flatten as s*B + b.
        x2 = x4.astype(f32).reshape(N, S * B, D)             # [N, S*B, D]

        out = pl.pallas_call(
            _attention_kernel,
            out_shape=jax.ShapeDtypeStruct((N, B, D), f32),
            grid_spec=pltpu.PrefetchScalarGridSpec(
                num_scalar_prefetch=0,
                grid=(N,),                                   # one step per instance
                in_specs=[
                    pl.BlockSpec((None, S * B, D), lambda n: (n, 0, 0)),
                    pl.BlockSpec((D, Ap), lambda n: (0, 0)),  # shared weights:
                    pl.BlockSpec((1, Ap), lambda n: (0, 0)),  # constant block index
                    pl.BlockSpec((1, Ap), lambda n: (0, 0)),  # -> stay resident
                ],
                out_specs=pl.BlockSpec((None, B, D), lambda n: (n, 0, 0)),
            ),
            compiler_params=pltpu.CompilerParams(
                # Independent instances: let v7x's two TensorCores split them.
                dimension_semantics=("parallel",)),
        )(x2, w1_p, b1_p, w2_p)

        return out[0] if squeeze else out

    return forward


def attention_ref(x_sbd, w1, b1, w2):
    """Pure-JAX reference mirroring the PyTorch forward exactly."""
    S = x_sbd.shape[0]
    h = jnp.tanh(jnp.einsum("sbd,ad->sba", x_sbd, w1) + b1)     # [S, B, A]
    attn = jnp.einsum("sba,oa->sbo", h, w2)                     # [S, B, 1]
    attn = jnp.transpose(jnp.squeeze(attn), (1, 0))             # [B, S]
    alphas = jax.nn.softmax(attn, axis=-1)                      # [B, S]
    alphas = alphas.reshape(-1, S, 1)                           # [B, S, 1]
    rnn_output = jnp.transpose(x_sbd, (1, 0, 2))                # [B, S, D]
    return jnp.sum(rnn_output * alphas, axis=1)                 # [B, D]


if __name__ == "__main__":
    S, B, D, A = 8, 4, 32, 50   # seq, batch, input_size, attention_size (module default)

    key = jax.random.PRNGKey(0)
    kx, kw1, kb1, kw2, kxs = jax.random.split(key, 5)

    x = jax.random.normal(kx, (S, B, D), dtype=jnp.float32)
    # Deterministic synthetic parameters (shapes follow nn.Linear conventions).
    w1 = jax.random.normal(kw1, (A, D), dtype=jnp.float32) * 0.1   # attention_w.weight
    b1 = jax.random.normal(kb1, (A,), dtype=jnp.float32) * 0.1     # attention_w.bias
    w2 = jax.random.normal(kw2, (1, A), dtype=jnp.float32) * 0.1   # attention_w2.weight

    fwd = make_attention_forward(w1, b1, w2)   # weight prep happens once, here

    # Tolerance is sized for the approximate EUP reciprocal (~2^-12 relative on
    # the softmax denominator) requested by the perf review; with an exact
    # divide the kernel matches the reference to < 1e-6.  Structural errors
    # would be O(1), so this still gates correctness.
    TOL = 1e-2

    # --- single module forward (matches the PyTorch spec) ---
    out = jax.block_until_ready(fwd(x))
    ref = attention_ref(x, w1, b1, w2)
    assert out.shape == (B, D), out.shape
    assert jnp.allclose(out, ref, atol=TOL, rtol=TOL), (
        f"max abs err = {jnp.max(jnp.abs(out - ref))}")

    # --- stacked independent instances: amortizes launch/DMA overhead and
    #     exercises the "parallel" grid axis (v7x megacore) ---
    xs = jax.random.normal(kxs, (4, S, B, D), dtype=jnp.float32)
    outs = jax.block_until_ready(fwd(xs))
    refs = jax.vmap(lambda xi: attention_ref(xi, w1, b1, w2))(xs)
    assert outs.shape == (4, B, D), outs.shape
    assert jnp.allclose(outs, refs, atol=TOL, rtol=TOL), (
        f"max abs err (stacked) = {jnp.max(jnp.abs(outs - refs))}")

    print("KERNEL_OK")
</pallas_src>

<mosaic_0001>
module attributes {stable_mosaic.version = 11 : i64} {
  func.func @_attention_kernel(%arg0: i32, %arg1: memref<1x32x32xf32, #tpu.memory_space<vmem>>, %arg2: memref<32x128xf32, #tpu.memory_space<vmem>>, %arg3: memref<1x128xf32, #tpu.memory_space<vmem>>, %arg4: memref<1x128xf32, #tpu.memory_space<vmem>>, %arg5: memref<1x4x32xf32, #tpu.memory_space<vmem>>) attributes {dimension_semantics = [#tpu.dimension_semantics<parallel>], iteration_bounds = array<i64: 1>, scalar_prefetch = 0 : i64, scratch_operands = 0 : i64, tpu.core_type = #tpu.core_type<tc>, window_params = [{transform_indices = @transform_0, window_bounds = array<i64: 1, 32, 32>}, {pipeline_mode = #tpu.pipeline_mode<synchronous>, transform_indices = @transform_1, window_bounds = array<i64: 32, 128>}, {pipeline_mode = #tpu.pipeline_mode<synchronous>, transform_indices = @transform_2, window_bounds = array<i64: 1, 128>}, {pipeline_mode = #tpu.pipeline_mode<synchronous>, transform_indices = @transform_3, window_bounds = array<i64: 1, 128>}, {transform_indices = @transform_4, window_bounds = array<i64: 1, 4, 32>}]} {
    %c0 = arith.constant 0 : index
    %c0_0 = arith.constant 0 : index
    %c0_1 = arith.constant 0 : index
    %0 = vector.load %arg1[%c0, %c0_0, %c0_1] : memref<1x32x32xf32, #tpu.memory_space<vmem>>, vector<1x32x32xf32>
    %1 = vector.shape_cast %0 : vector<1x32x32xf32> to vector<32x32xf32>
    %c0_2 = arith.constant 0 : index
    %c0_3 = arith.constant 0 : index
    %2 = vector.load %arg2[%c0_2, %c0_3] : memref<32x128xf32, #tpu.memory_space<vmem>>, vector<32x128xf32>
    %cst = arith.constant dense<0.000000e+00> : vector<32x128xf32>
    %3 = tpu.matmul %1, %2, %cst {dimension_numbers = #tpu.dot_dimension_numbers<[1], [0], [0], [1], [0, 0, 1, 1], [], []>} : vector<32x32xf32>, vector<32x128xf32>, vector<32x128xf32> -> vector<32x128xf32>
    %c0_4 = arith.constant 0 : index
    %c0_5 = arith.constant 0 : index
    %4 = vector.load %arg3[%c0_4, %c0_5] : memref<1x128xf32, #tpu.memory_space<vmem>>, vector<1x128xf32>
    %5 = vector.broadcast %4 : vector<1x128xf32> to vector<32x128xf32>
    %6 = arith.addf %3, %5 : vector<32x128xf32>
    %7 = math.tanh %6 : vector<32x128xf32>
    %c0_6 = arith.constant 0 : index
    %c0_7 = arith.constant 0 : index
    %8 = vector.load %arg4[%c0_6, %c0_7] : memref<1x128xf32, #tpu.memory_space<vmem>>, vector<1x128xf32>
    %9 = vector.broadcast %8 : vector<1x128xf32> to vector<32x128xf32>
    %10 = arith.mulf %7, %9 : vector<32x128xf32>
    %cst_8 = arith.constant dense<0.000000e+00> : vector<32xf32>
    %11 = vector.multi_reduction <add>, %10, %cst_8 [1] : vector<32x128xf32> to vector<32xf32>
    %12 = vector.shape_cast %11 : vector<32xf32> to vector<32x1xf32>
    %13 = tpu.iota {dimensions = array<i32: 0>} : vector<32x4xi32>
    %c4_i32 = arith.constant 4 : i32
    %c0_i32 = arith.constant 0 : i32
    %14 = arith.cmpi eq, %c4_i32, %c0_i32 : i32
    %c1_i32 = arith.constant 1 : i32
    %15 = arith.select %14, %c1_i32, %c4_i32 : i32
    %16 = vector.broadcast %15 : i32 to vector<32x4xi32>
    %17 = arith.remsi %13, %16 : vector<32x4xi32>
    %c0_i32_9 = arith.constant 0 : i32
    %18 = vector.broadcast %c0_i32_9 : i32 to vector<32x4xi32>
    %19 = arith.cmpi ne, %17, %18 : vector<32x4xi32>
    %c0_i32_10 = arith.constant 0 : i32
    %20 = vector.broadcast %c0_i32_10 : i32 to vector<32x4xi32>
    %21 = arith.cmpi slt, %17, %20 : vector<32x4xi32>
    %c0_i32_11 = arith.constant 0 : i32
    %22 = arith.cmpi slt, %15, %c0_i32_11 : i32
    %23 = vector.broadcast %22 : i1 to vector<32x4xi1>
    %24 = vector.broadcast %23 : vector<32x4xi1> to vector<32x4xi1>
    %25 = arith.xori %21, %24 : vector<32x4xi1>
    %26 = arith.andi %25, %19 : vector<32x4xi1>
    %27 = vector.broadcast %15 : i32 to vector<32x4xi32>
    %28 = arith.addi %17, %27 : vector<32x4xi32>
    %29 = arith.select %26, %28, %17 : vector<32x4xi1>, vector<32x4xi32>
    %30 = tpu.iota {dimensions = array<i32: 1>} : vector<32x4xi32>
    %31 = arith.cmpi eq, %29, %30 : vector<32x4xi32>
    %cst_12 = arith.constant 0xFF800000 : f32
    %32 = vector.shape_cast %12 : vector<32x1xf32> to vector<32x1xf32>
    %33 = vector.broadcast %32 : vector<32x1xf32> to vector<32x4xf32>
    %34 = vector.broadcast %cst_12 : f32 to vector<32x4xf32>
    %35 = arith.select %31, %33, %34 : vector<32x4xi1>, vector<32x4xf32>
    %cst_13 = arith.constant dense<0xFF800000> : vector<4xf32>
    %36 = vector.multi_reduction <maximumf>, %35, %cst_13 [0] : vector<32x4xf32> to vector<4xf32>
    %37 = vector.shape_cast %36 : vector<4xf32> to vector<1x4xf32>
    %cst_14 = arith.constant 0.000000e+00 : f32
    %38 = vector.shape_cast %37 : vector<1x4xf32> to vector<1x4xf32>
    %39 = vector.broadcast %38 : vector<1x4xf32> to vector<32x4xf32>
    %40 = vector.broadcast %cst_14 : f32 to vector<32x4xf32>
    %41 = arith.select %31, %39, %40 : vector<32x4xi1>, vector<32x4xf32>
    %cst_15 = arith.constant dense<0.000000e+00> : vector<32xf32>
    %42 = vector.multi_reduction <add>, %41, %cst_15 [1] : vector<32x4xf32> to vector<32xf32>
    %43 = vector.shape_cast %42 : vector<32xf32> to vector<32x1xf32>
    %44 = arith.subf %12, %43 : vector<32x1xf32>
    %45 = math.exp %44 : vector<32x1xf32>
    %cst_16 = arith.constant 0.000000e+00 : f32
    %46 = vector.shape_cast %45 : vector<32x1xf32> to vector<32x1xf32>
    %47 = vector.broadcast %46 : vector<32x1xf32> to vector<32x4xf32>
    %48 = vector.broadcast %cst_16 : f32 to vector<32x4xf32>
    %49 = arith.select %31, %47, %48 : vector<32x4xi1>, vector<32x4xf32>
    %cst_17 = arith.constant dense<0.000000e+00> : vector<4xf32>
    %50 = vector.multi_reduction <add>, %49, %cst_17 [0] : vector<32x4xf32> to vector<4xf32>
    %51 = vector.shape_cast %50 : vector<4xf32> to vector<1x4xf32>
    %cst_18 = arith.constant 0.000000e+00 : f32
    %52 = vector.shape_cast %51 : vector<1x4xf32> to vector<1x4xf32>
    %53 = vector.broadcast %52 : vector<1x4xf32> to vector<32x4xf32>
    %54 = vector.broadcast %cst_18 : f32 to vector<32x4xf32>
    %55 = arith.select %31, %53, %54 : vector<32x4xi1>, vector<32x4xf32>
    %cst_19 = arith.constant dense<0.000000e+00> : vector<32xf32>
    %56 = vector.multi_reduction <add>, %55, %cst_19 [1] : vector<32x4xf32> to vector<32xf32>
    %57 = vector.shape_cast %56 : vector<32xf32> to vector<32x1xf32>
    %58 = tpu.reciprocal %57 {approx = true} : vector<32x1xf32> -> vector<32x1xf32>
    %59 = arith.mulf %45, %58 : vector<32x1xf32>
    %60 = vector.broadcast %59 : vector<32x1xf32> to vector<32x32xf32>
    %61 = arith.mulf %1, %60 : vector<32x32xf32>
    %62 = tpu.iota {dimensions = array<i32: 1>} : vector<4x32xi32>
    %c4_i32_20 = arith.constant 4 : i32
    %c0_i32_21 = arith.constant 0 : i32
    %63 = arith.cmpi eq, %c4_i32_20, %c0_i32_21 : i32
    %c1_i32_22 = arith.constant 1 : i32
    %64 = arith.select %63, %c1_i32_22, %c4_i32_20 : i32
    %65 = vector.broadcast %64 : i32 to vector<4x32xi32>
    %66 = arith.remsi %62, %65 : vector<4x32xi32>
    %c0_i32_23 = arith.constant 0 : i32
    %67 = vector.broadcast %c0_i32_23 : i32 to vector<4x32xi32>
    %68 = arith.cmpi ne, %66, %67 : vector<4x32xi32>
    %c0_i32_24 = arith.constant 0 : i32
    %69 = vector.broadcast %c0_i32_24 : i32 to vector<4x32xi32>
    %70 = arith.cmpi slt, %66, %69 : vector<4x32xi32>
    %c0_i32_25 = arith.constant 0 : i32
    %71 = arith.cmpi slt, %64, %c0_i32_25 : i32
    %72 = vector.broadcast %71 : i1 to vector<4x32xi1>
    %73 = vector.broadcast %72 : vector<4x32xi1> to vector<4x32xi1>
    %74 = arith.xori %70, %73 : vector<4x32xi1>
    %75 = arith.andi %74, %68 : vector<4x32xi1>
    %76 = vector.broadcast %64 : i32 to vector<4x32xi32>
    %77 = arith.addi %66, %76 : vector<4x32xi32>
    %78 = arith.select %75, %77, %66 : vector<4x32xi1>, vector<4x32xi32>
    %79 = tpu.iota {dimensions = array<i32: 0>} : vector<4x32xi32>
    %80 = arith.cmpi eq, %78, %79 : vector<4x32xi32>
    %81 = arith.extui %80 : vector<4x32xi1> to vector<4x32xi32>
    %82 = arith.sitofp %81 : vector<4x32xi32> to vector<4x32xf32>
    %cst_26 = arith.constant dense<0.000000e+00> : vector<4x32xf32>
    %83 = tpu.matmul %82, %61, %cst_26 {dimension_numbers = #tpu.dot_dimension_numbers<[1], [0], [0], [1], [0, 0, 1, 1], [], []>} : vector<4x32xf32>, vector<32x32xf32>, vector<4x32xf32> -> vector<4x32xf32>
    %c0_27 = arith.constant 0 : index
    %c0_28 = arith.constant 0 : index
    %c0_29 = arith.constant 0 : index
    %84 = vector.load %arg5[%c0_27, %c0_28, %c0_29] : memref<1x4x32xf32, #tpu.memory_space<vmem>>, vector<1x4x32xf32>
    %85 = vector.shape_cast %84 : vector<1x4x32xf32> to vector<4x32xf32>
    %86 = vector.shape_cast %83 : vector<4x32xf32> to vector<1x4x32xf32>
    tpu.vector_store %arg5[%c0_27, %c0_28, %c0_29], %86 {strides = array<i32>} : memref<1x4x32xf32, #tpu.memory_space<vmem>>, vector<1x4x32xf32>,
    return
  }
  func.func @transform_0(%arg0: i32) -> (i32, i32, i32) {
    %c0_i32 = arith.constant 0 : i32
    %c0_i32_0 = arith.constant 0 : i32
    %c0_i32_1 = arith.constant 0 : i32
    return %arg0, %c0_i32, %c0_i32_0 : i32, i32, i32
  }
  func.func @transform_1(%arg0: i32) -> (i32, i32) {
    %c0_i32 = arith.constant 0 : i32
    %c0_i32_0 = arith.constant 0 : i32
    %c0_i32_1 = arith.constant 0 : i32
    return %c0_i32, %c0_i32_0 : i32, i32
  }
  func.func @transform_2(%arg0: i32) -> (i32, i32) {
    %c0_i32 = arith.constant 0 : i32
    %c0_i32_0 = arith.constant 0 : i32
    %c0_i32_1 = arith.constant 0 : i32
    return %c0_i32, %c0_i32_0 : i32, i32
  }
  func.func @transform_3(%arg0: i32) -> (i32, i32) {
    %c0_i32 = arith.constant 0 : i32
    %c0_i32_0 = arith.constant 0 : i32
    %c0_i32_1 = arith.constant 0 : i32
    return %c0_i32, %c0_i32_0 : i32, i32
  }
  func.func @transform_4(%arg0: i32) -> (i32, i32, i32) {
    %c0_i32 = arith.constant 0 : i32
    %c0_i32_0 = arith.constant 0 : i32
    %c0_i32_1 = arith.constant 0 : i32
    return %arg0, %c0_i32, %c0_i32_0 : i32, i32, i32
  }
}

</mosaic_0001>

<llo_original>
// kernel: forward.1
$region0: #{forward.1}
  #allocation0 [shape = 'u32[]', space=smem, size = 0x4, offset = 0x4, fixed_abs, tag = 'smem constant byte address 0x4 - core index']
  #allocation1 [shape = 'u32[72,128]{1,0:T(1,128)}', space=vmem, size = 0x9000, scoped, tag = 'internal scratch']
  %s0 = inlined_call_operand.hbm [shape: f32[1,32,32], index: 0, kind: input, shape index: {}]
  %s1 = inlined_call_operand.hbm [shape: f32[32,128], index: 1, kind: input, shape index: {}]
  %s2 = inlined_call_operand.vmem [shape: f32[1,128], index: 2, kind: input, shape index: {}]
  %s3 = inlined_call_operand.vmem [shape: f32[1,128], index: 3, kind: input, shape index: {}]
  %s4 = inlined_call_operand.hbm [shape: f32[1,4,32], index: 4, kind: output, shape index: {}]
  %s5 = sld [smem:[#allocation0]]
  $region34: #{forward.1} parent=0
    _
  %s7 = ssub.s32 1, %s5
  %s8 = scalar_select 0, %s7, %s5
  $region1: #{forward.1} parent=0
    #allocation2 [shape = 'u8[16384]{0}', space=vmem, size = 0x4000, scoped, tag = 'input window, operand 0, single buffered']
    #allocation3 [shape = 's32[1]{0}', space=sflag, size = 0x4, scoped, tag = 'scoped memory for forward.1']
    #allocation4 [shape = 's32[1]{0}', space=sflag, size = 0x4, scoped, tag = 'scoped memory for forward.1']
    #allocation5 [shape = 'u8[16384]{0}', space=vmem, size = 0x4000, scoped, tag = 'input window, operand 1, single buffered']
    #allocation6 [shape = 's32[1]{0}', space=sflag, size = 0x4, scoped, tag = 'scoped memory for forward.1']
    #allocation7 [shape = 'u8[2048]{0}', space=vmem, size = 0x800, scoped, tag = 'output window, operand 0, single buffered']
    %9 = vsyncpa [#allocation3], 0
    %10 = vsyncpa [#allocation6], 0
    %11 = vsyncpa [#allocation4], 0
    // Predicated region
    $region2: #{forward.1} parent=1 // pred_check
      _
    $region3: #{forward.1} parent=1 // pred_check_branch
      %13 = sbr.rel (0) target = $region5
    $region4: #{forward.1} parent=1 // pred_region
      %15 = vsyncadd [#allocation3], 0
      %s16 = sshll.u32 %s0, 4
      %s17 = int_to_ptr.hbm [resolvable:$true] %s16
      %s18 = sshll.u32 [#allocation2], 4
      %s19 = int_to_ptr.vmem [resolvable:$true] %s18
      %24 = dma.hbm_to_vmem [thread:$0]  %s17, 512, %s19, [#allocation3], 128, 128, 8
    $region5: #{forward.1} parent=1 // pred_fallthru
      _
    // Predicated region
    $region6: #{forward.1} parent=1 // pred_check
      _
    $region7: #{forward.1} parent=1 // pred_check_branch
      %26 = sbr.rel (0) target = $region9
    $region8: #{forward.1} parent=1 // pred_region
      %28 = vsyncadd [#allocation6], 0
      %s29 = sshll.u32 %s1, 4
      %s30 = int_to_ptr.hbm [resolvable:$true] %s29
      %s31 = sshll.u32 [#allocation5], 4
      %s32 = int_to_ptr.vmem [resolvable:$true] %s31
      %37 = dma.hbm_to_vmem [thread:$0]  %s30, 512, %s32, [#allocation6], 128, 128, 8
    $region9: #{forward.1} parent=1 // pred_fallthru
      _
    // Predicated region
    $region10: #{forward.1} parent=1 // pred_check
      _
    $region11: #{forward.1} parent=1 // pred_check_branch
      %39 = sbr.rel (0) target = $region13
    $region12: #{forward.1} parent=1 // pred_region
      _
    $region13: #{forward.1} parent=1 // pred_fallthru
      _
    // Predicated region
    $region14: #{forward.1} parent=1 // pred_check
      _
    $region15: #{forward.1} parent=1 // pred_check_branch
      %41 = sbr.rel (0) target = $region17
    $region16: #{forward.1} parent=1 // pred_region
      _
    $region17: #{forward.1} parent=1 // pred_fallthru
      _
    // Predicated region
    $region18: #{forward.1} parent=1 // pred_check
      _
    $region19: #{forward.1} parent=1 // pred_check_branch
      %43 = sbr.rel (0) target = $region21
    $region20: #{forward.1} parent=1 // pred_region
      %45 = dma.done [#allocation3], 512
    $region21: #{forward.1} parent=1 // pred_fallthru
      _
    // Predicated region
    $region22: #{forward.1} parent=1 // pred_check
      _
    $region23: #{forward.1} parent=1 // pred_check_branch
      %47 = sbr.rel (0) target = $region25
    $region24: #{forward.1} parent=1 // pred_region
      %49 = dma.done [#allocation6], 512
    $region25: #{forward.1} parent=1 // pred_fallthru
      _
    %v50 = vld [vmem:[#allocation2] sm:$0xff]
    %v51 = vld [vmem:[#allocation2 + $0x8] sm:$0xff]
    %v52 = vld [vmem:[#allocation2 + $0x10] sm:$0xff]
    %v53 = vld [vmem:[#allocation2 + $0x18] sm:$0xff]
    %v54 = vld [vmem:[#allocation5] sm:$0xff]
    %v55 = vld [vmem:[#allocation5 + $0x8] sm:$0xff]
    %v56 = vld [vmem:[#allocation5 + $0x10] sm:$0xff]
    %v57 = vld [vmem:[#allocation5 + $0x18] sm:$0xff]
    %v58 = vld [vmem:[%s2] sm:$0x1]
    %v60 = vperm.slane %v58, 0
    %vm62 = vcmask 261120
    %v64 = vsel %vm62, %v50, 0
    %v67 = vsel %vm62, %v51, 0
    %v70 = vsel %vm62, %v52, 0
    %v73 = vsel %vm62, %v53, 0
    %75 = vmatpush.msra.mxu0 0.0
    %76 = vmatpush.msra.mxu0 0.0
    %77 = vmatpush.msra.mxu0 0.0
    %78 = vmatpush.msra.mxu0 0.0
    %79 = vmatpush.msra.mxu0 0.0
    %80 = vmatpush.msra.mxu0 0.0
    %81 = vmatpush.msra.mxu0 0.0
    %82 = vmatpush.msra.mxu0 0.0
    %83 = vmatpush.msra.mxu0 0.0
    %84 = vmatpush.msra.mxu0 0.0
    %85 = vmatpush.msra.mxu0 0.0
    %86 = vmatpush.msra.mxu0 0.0
    %87 = vmatpush.msra.mxu0 %v57
    %88 = vmatpush.msra.mxu0 %v56
    %89 = vmatpush.msra.mxu0 %v55
    %90 = vmatpush.msra.mxu0 %v54
    %91 = vmatmul.f32.gmra.mxu0 %v64
    %v92 = vpop.f32.mrf.mxu0
    %v93 = vadd.f32 %v60, %v92
    %94 = vmatmul.f32.gmra.mxu0 %v67
    %v95 = vpop.f32.mrf.mxu0
    %v96 = vadd.f32 %v60, %v95
    %97 = vmatmul.f32.gmra.mxu0 %v70
    %v98 = vpop.f32.mrf.mxu0
    %v99 = vadd.f32 %v60, %v98
    %100 = vmatmul.f32.gmra.mxu0 %v73
    %v101 = vpop.f32.mrf.mxu0
    %v102 = vadd.f32 %v60, %v101
    %103 = vdwg.mxu0
    %v104 = vtanh.pop %v93
    %v105 = vtanh.pop %v96
    %v106 = vtanh.pop %v99
    %v107 = vtanh.pop %v102
    %v108 = vld [vmem:[%s3] sm:$0x1]
    %v110 = vperm.slane %v108, 0
    %v112 = vmul.f32 %v104, %v110
    %v113 = vmul.f32 %v105, %v110
    %v114 = vmul.f32 %v106, %v110
    %v115 = vmul.f32 %v107, %v110
    %116 = vadd.xlane.f32.xlu0 %v112
    %v117 = vpop.xlane.xlu0 %116
    %118 = vadd.xlane.f32.xlu0 %v113
    %v119 = vpop.xlane.xlu0 %118
    %120 = vadd.xlane.f32.xlu0 %v114
    %v121 = vpop.xlane.xlu0 %120
    %122 = vadd.xlane.f32.xlu0 %v115
    %v123 = vpop.xlane.xlu0 %122
    %v124 = vlaneseq
    %v125 = vshrl.u32 %v124, 7
    %v126 = vadd.s32 %v125, 8
    %v127 = vadd.s32 %v125, 16
    %v128 = vadd.s32 %v125, 24
    %vm129 = vcmp.lt.s32.totalorder %v125, 0
    %v130 = vsub.s32 0, %v125
    %v131 = vsel %vm129, %v130, %v125
    %v132 = vshrl.u32 %v131, 2
    %v133 = vand.u32 %v131, 3
    %v134 = vsub.s32 0, %v133
    %v135 = vsel %vm129, %v134, %v133
    %vm136 = vcmp.lt.s32.totalorder %v126, 0
    %v137 = vsub.s32 0, %v126
    %v138 = vsel %vm136, %v137, %v126
    %v139 = vshrl.u32 %v138, 2
    %v140 = vand.u32 %v138, 3
    %v141 = vsub.s32 0, %v140
    %v142 = vsel %vm136, %v141, %v140
    %vm143 = vcmp.lt.s32.totalorder %v127, 0
    %v144 = vsub.s32 0, %v127
    %v145 = vsel %vm143, %v144, %v127
    %v146 = vshrl.u32 %v145, 2
    %v147 = vand.u32 %v145, 3
    %v148 = vsub.s32 0, %v147
    %v149 = vsel %vm143, %v148, %v147
    %vm150 = vcmp.lt.s32.totalorder %v128, 0
    %v151 = vsub.s32 0, %v128
    %v152 = vsel %vm150, %v151, %v128
    %v153 = vshrl.u32 %v152, 2
    %v154 = vand.u32 %v152, 3
    %v155 = vsub.s32 0, %v154
    %v156 = vsel %vm150, %v155, %v154
    %vm157 = vcmp.ne.s32.totalorder %v135, 0
    %vm158 = vcmp.ne.s32.totalorder %v142, 0
    %vm159 = vcmp.ne.s32.totalorder %v149, 0
    %vm160 = vcmp.ne.s32.totalorder %v156, 0
    %vm161 = vcmp.lt.s32.totalorder %v135, 0
    %vm162 = vcmp.lt.s32.totalorder %v142, 0
    %vm163 = vcmp.lt.s32.totalorder %v149, 0
    %vm164 = vcmp.lt.s32.totalorder %v156, 0
    %vm165 = vmand %vm161, %vm157
    %vm166 = vmand %vm162, %vm158
    %vm167 = vmand %vm163, %vm159
    %vm168 = vmand %vm164, %vm160
    %v169 = vadd.s32 %v135, 4
    %v170 = vadd.s32 %v142, 4
    %v171 = vadd.s32 %v149, 4
    %v172 = vadd.s32 %v156, 4
    %v173 = vsel %vm165, %v169, %v135
    %v174 = vsel %vm166, %v170, %v142
    %v175 = vsel %vm167, %v171, %v149
    %v176 = vsel %vm168, %v172, %v156
    %v177 = vlaneseq
    %v178 = vand.u32 %v177, 127
    %vm179 = vcmp.eq.s32.totalorder %v173, %v178
    %vm180 = vcmp.eq.s32.totalorder %v174, %v178
    %vm181 = vcmp.eq.s32.totalorder %v175, %v178
    %vm182 = vcmp.eq.s32.totalorder %v176, %v178
    %v183 = vsel %vm179, %v117, -inf
    %v184 = vsel %vm180, %v119, -inf
    %v185 = vsel %vm181, %v121, -inf
    %v186 = vsel %vm182, %v123, -inf
    %vm187 = vcmask 31744
    %v188 = vsel %vm187, %v183, -inf
    %v189 = vsel %vm187, %v184, -inf
    %v190 = vsel %vm187, %v185, -inf
    %v191 = vsel %vm187, %v186, -inf
    %v192 = vmax.f32 %v188, %v189
    %v193 = vmax.f32 %v190, %v191
    %v194 = vmax.f32 %v192, %v193
    %v195 = vrot.slane %v194, 4
    %v196 = vmax.f32 %v194, %v195
    %v197 = vrot.slane %v196, 2
    %v198 = vmax.f32 %v196, %v197
    %v199 = vrot.slane %v198, 1
    %v200 = vmax.f32 %v198, %v199
    %v201 = vsel %vm179, %v200, 0.0
    %v202 = vsel %vm180, %v200, 0.0
    %v203 = vsel %vm181, %v200, 0.0
    %v204 = vsel %vm182, %v200, 0.0
    %v205 = vsel %vm187, %v201, 0.0
    %206 = vadd.xlane.f32.xlu0 %v205
    %v207 = vpop.xlane.xlu0 %206
    %v208 = vsel %vm187, %v202, 0.0
    %209 = vadd.xlane.f32.xlu0 %v208
    %v210 = vpop.xlane.xlu0 %209
    %v211 = vsel %vm187, %v203, 0.0
    %212 = vadd.xlane.f32.xlu0 %v211
    %v213 = vpop.xlane.xlu0 %212
    %v214 = vsel %vm187, %v204, 0.0
    %215 = vadd.xlane.f32.xlu0 %v214
    %v216 = vpop.xlane.xlu0 %215
    %v217 = vsub.f32 %v117, %v207
    %v218 = vsub.f32 %v119, %v210
    %v219 = vsub.f32 %v121, %v213
    %v220 = vsub.f32 %v123, %v216
    %v221 = vmul.f32 %v217, 1.442695
    %v222 = vpow.pop %v221
    %v223 = vmul.f32 %v218, 1.442695
    %v224 = vpow.pop %v223
    %v225 = vmul.f32 %v219, 1.442695
    %v226 = vpow.pop %v225
    %v227 = vmul.f32 %v220, 1.442695
    %v228 = vpow.pop %v227
    %v229 = vsel %vm179, %v222, 0.0
    %v230 = vsel %vm180, %v224, 0.0
    %v231 = vsel %vm181, %v226, 0.0
    %v232 = vsel %vm182, %v228, 0.0
    %v233 = vsel %vm187, %v229, 0.0
    %v234 = vsel %vm187, %v230, 0.0
    %v235 = vadd.f32 %v233, %v234
    %v236 = vsel %vm187, %v231, 0.0
    %v237 = vadd.f32 %v235, %v236
    %v238 = vsel %vm187, %v232, 0.0
    %v239 = vadd.f32 %v237, %v238
    %v240 = vrot.slane %v239, 4
    %v241 = vadd.f32 %v239, %v240
    %v242 = vrot.slane %v241, 2
    %v243 = vadd.f32 %v241, %v242
    %v244 = vrot.slane %v243, 1
    %v245 = vadd.f32 %v243, %v244
    %v246 = vsel %vm179, %v245, 0.0
    %v247 = vsel %vm180, %v245, 0.0
    %v248 = vsel %vm181, %v245, 0.0
    %v249 = vsel %vm182, %v245, 0.0
    %v250 = vsel %vm187, %v246, 0.0
    %251 = vadd.xlane.f32.xlu0 %v250
    %v252 = vpop.xlane.xlu0 %251
    %v253 = vsel %vm187, %v247, 0.0
    %254 = vadd.xlane.f32.xlu0 %v253
    %v255 = vpop.xlane.xlu0 %254
    %v256 = vsel %vm187, %v248, 0.0
    %257 = vadd.xlane.f32.xlu0 %v256
    %v258 = vpop.xlane.xlu0 %257
    %v259 = vsel %vm187, %v249, 0.0
    %260 = vadd.xlane.f32.xlu0 %v259
    %v261 = vpop.xlane.xlu0 %260
    %v262 = vrcp.pop %v252
    %v263 = vrcp.pop %v255
    %v264 = vrcp.pop %v258
    %v265 = vrcp.pop %v261
    %v266 = vmul.f32 %v222, %v262
    %v267 = vmul.f32 %v224, %v263
    %v268 = vmul.f32 %v226, %v264
    %v269 = vmul.f32 %v228, %v265
    %v270 = vmul.f32 %v50, %v266
    %v271 = vmul.f32 %v51, %v267
    %v272 = vmul.f32 %v52, %v268
    %v273 = vmul.f32 %v53, %v269
    %vm274 = vcmp.lt.s32.totalorder %v178, 0
    %v275 = vsub.s32 0, %v178
    %v276 = vsel %vm274, %v275, %v178
    %v277 = vshrl.u32 %v276, 2
    %v278 = vand.u32 %v276, 3
    %v279 = vsub.s32 0, %v278
    %v280 = vsel %vm274, %v279, %v278
    %vm281 = vcmp.ne.s32.totalorder %v280, 0
    %vm282 = vcmp.lt.s32.totalorder %v280, 0
    %vm283 = vmand %vm282, %vm281
    %v284 = vadd.s32 %v280, 4
    %v285 = vsel %vm283, %v284, %v280
    %vm286 = vcmp.eq.s32.totalorder %v285, %v125
    %v287 = vsel %vm286, 1, 0
    %v288 = vcvt.s32.f32 %v287
    %v290 = vsel %vm62, %v288, 0
    %292 = vmatpush.msra.mxu0 0.0
    %293 = vmatpush.msra.mxu0 0.0
    %294 = vmatpush.msra.mxu0 0.0
    %295 = vmatpush.msra.mxu0 0.0
    %296 = vmatpush.msra.mxu0 0.0
    %297 = vmatpush.msra.mxu0 0.0
    %298 = vmatpush.msra.mxu0 0.0
    %299 = vmatpush.msra.mxu0 0.0
    %300 = vmatpush.msra.mxu0 0.0
    %301 = vmatpush.msra.mxu0 0.0
    %302 = vmatpush.msra.mxu0 0.0
    %303 = vmatpush.msra.mxu0 0.0
    %304 = vmatpush.msra.mxu0 %v273
    %305 = vmatpush.msra.mxu0 %v272
    %306 = vmatpush.msra.mxu0 %v271
    %307 = vmatpush.msra.mxu0 %v270
    %308 = vmatmul.f32.gmra.mxu0 %v290
    %v309 = vpop.f32.mrf.mxu0
    %v310 = vadd.f32 0.0, %v309
    %311 = vdwg.mxu0
    %vm312 = vcmask 257024
    %313 = vst.msk [vmem:[#allocation7] sm:$0xf] %vm312, %v310
    // Predicated region
    $region26: #{forward.1} parent=1 // pred_check
      _
    $region27: #{forward.1} parent=1 // pred_check_branch
      %315 = sbr.rel (0) target = $region29
    $region28: #{forward.1} parent=1 // pred_region
      %317 = vsyncadd [#allocation4], 0
      %s319 = sshll.u32 [#allocation7], 4
      %s320 = int_to_ptr.vmem [resolvable:$true] %s319
      %s321 = sshll.u32 %s4, 4
      %s322 = int_to_ptr.hbm [resolvable:$true] %s321
      %324 = dma.vmem_to_hbm [thread:$0]  %s320, 64, %s322, [#allocation4]
    $region29: #{forward.1} parent=1 // pred_fallthru
      _
    // Predicated region
    $region30: #{forward.1} parent=1 // pred_check
      _
    $region31: #{forward.1} parent=1 // pred_check_branch
      %326 = sbr.rel (0) target = $region33
    $region32: #{forward.1} parent=1 // pred_region
      %328 = dma.done [#allocation4], 64
    $region33: #{forward.1} parent=1 // pred_fallthru
      _
    %329 = vsyncpa [#allocation3], 1
    %330 = vsyncpa [#allocation6], 1
    %331 = vsyncpa [#allocation4], 1

</llo_original>
